<compile_context>
chip_gen: v7x
topology: tpu7x:2x2x1
jax: 0.10.0
libtpu: 0.0.40
codegen_flags: <defaults>
</compile_context>

<pallas_src>
import functools

import jax
import jax.numpy as jnp
from jax.experimental import pallas as pl
from jax.experimental.pallas import tpu as pltpu

_LANE = 128      # lane width: hidden/output feature dims padded to this
_SUBLANE = 8     # sublane width: minimum batch-row granularity


def _round_up(x, m):
    return ((x + m - 1) // m) * m


def _tpu_generation():
    """Best-effort TPU generation sniffing (5, 6, 7, ...); 0 if unknown."""
    try:
        kind = jax.devices()[0].device_kind.lower()
    except Exception:
        return 0
    if "v7" in kind or "7x" in kind:
        return 7
    if "v6" in kind:
        return 6
    if "v5" in kind:
        return 5
    if "v4" in kind:
        return 4
    return 0


def _pick_batch_tile(m_pad, tm_cap, ensure_two_steps):
    """Pick a batch tile balancing padding waste vs per-grid-step overhead."""
    candidates = [t for t in (512, 256, 128, 64, 32, 16, 8) if t <= tm_cap]
    best_tm, best_cost = _SUBLANE, None
    for t in candidates:
        steps = -(-m_pad // t)
        # cost ~ total rows computed (incl. padding) + ~32-rows-equivalent per step
        cost = steps * t + 32 * steps
        if best_cost is None or cost < best_cost:
            best_tm, best_cost = t, cost
    tm = _round_up(min(best_tm, m_pad), _SUBLANE)
    if ensure_two_steps and _round_up(m_pad, tm) // tm < 2 and m_pad > _SUBLANE:
        # v7x: split into >=2 sublane-aligned tiles so both TensorCores work.
        tm = _round_up(m_pad // 2, _SUBLANE)
    return tm, _round_up(m_pad, tm)


def _fused_mlp_kernel(*refs, n_layers, use_bf16_mxu, carry_dtype):
    """refs = (x_ref, w0, b0, w1, b1, ..., w{L-1}, b{L-1}, o_ref).

    x_ref : (tm, D0) f32 activation tile (feature dim unpadded)
    w_l   : (D_l[_pad], D_{l+1}_pad) resident weight (bf16 or f32)
    b_l   : (1, D_{l+1}_pad) f32 bias
    o_ref : (tm, D_L_pad) f32 output tile
    """
    x_ref = refs[0]
    o_ref = refs[-1]
    params = refs[1:-1]

    x = x_ref[...]  # f32 tile
    for layer in range(n_layers):
        w = params[2 * layer][...]
        b = params[2 * layer + 1][...]
        lhs = x
        if use_bf16_mxu and lhs.dtype != jnp.bfloat16:
            lhs = lhs.astype(jnp.bfloat16)
        y = jnp.dot(lhs, w, preferred_element_type=jnp.float32)  # MXU, f32 acc
        y = y + b                                                 # f32 epilogue
        if layer < n_layers - 1:
            y = jnp.maximum(y, 0.0)                               # ReLU (hidden)
            x = y.astype(carry_dtype)
        else:
            x = y
    o_ref[...] = x.astype(o_ref.dtype)


def fused_mlp(x, weights, biases, dims_pad, output_dim, *,
              use_bf16_mxu, carry_dtype, tm_cap, ensure_two_steps,
              vmem_cap_bytes):
    """Run the whole MLP in one pallas_call with resident (single-buffered) weights."""
    M, d_in = x.shape
    n_layers = len(weights)
    d_out_pad = dims_pad[-1]

    m_pad0 = _round_up(M, _SUBLANE)
    tm, m_pad = _pick_batch_tile(m_pad0, tm_cap, ensure_two_steps)

    # Pad only the batch dim, and only when necessary (no full padded copy).
    x_p = x if m_pad == M else jnp.pad(x, ((0, m_pad - M), (0, 0)))

    # Input: pipelined (double-buffered) batch tiles; feature dim is the full
    # array dim, so the (8,128) block constraint is satisfied without padding.
    in_specs = [pl.BlockSpec((tm, d_in), lambda i: (i, 0))]
    args = [x_p]

    # Weights/biases: whole-array resident in VMEM, single-buffered.
    resident_spec = pl.BlockSpec(memory_space=pltpu.MemorySpace.VMEM)
    for layer in range(n_layers):
        in_specs.append(resident_spec)
        in_specs.append(resident_spec)
        args.append(weights[layer])
        args.append(biases[layer])

    out_spec = pl.BlockSpec((tm, d_out_pad), lambda i: (i, 0))

    # Explicit VMEM budget: resident params + double-buffered x/out tiles +
    # largest inter-layer activation, with ~50% headroom, capped per-TC.
    param_bytes = sum(int(w.size) * jnp.dtype(w.dtype).itemsize for w in weights)
    param_bytes += sum(int(b.size) * jnp.dtype(b.dtype).itemsize for b in biases)
    act_bytes = 2 * tm * d_in * 4 + 2 * tm * d_out_pad * 4
    inter_bytes = 2 * tm * max(dims_pad) * 4
    vmem_limit = int(1.5 * (param_bytes + act_bytes + inter_bytes)) + (4 << 20)
    vmem_limit = max(8 << 20, min(vmem_limit, vmem_cap_bytes))

    flops = 2 * m_pad * sum(int(w.shape[0]) * int(w.shape[1]) for w in weights)
    bytes_accessed = int(x_p.size) * 4 + param_bytes + m_pad * d_out_pad * 4

    y_p = pl.pallas_call(
        functools.partial(
            _fused_mlp_kernel,
            n_layers=n_layers,
            use_bf16_mxu=use_bf16_mxu,
            carry_dtype=carry_dtype,
        ),
        out_shape=jax.ShapeDtypeStruct((m_pad, d_out_pad), jnp.float32),
        grid_spec=pltpu.PrefetchScalarGridSpec(
            num_scalar_prefetch=0,
            grid=(m_pad // tm,),
            in_specs=in_specs,
            out_specs=out_spec,
        ),
        compiler_params=pltpu.CompilerParams(
            dimension_semantics=("parallel",),
            vmem_limit_bytes=vmem_limit,
        ),
        cost_estimate=pl.CostEstimate(
            flops=flops, transcendentals=0, bytes_accessed=bytes_accessed),
    )(*args)

    return y_p[:M, :output_dim]


class PallasMLP:
    """Mirrors the PyTorch MLP: [Linear -> ReLU]* -> Linear, fused in one kernel."""

    def __init__(self, input_dim, hidden_dims, output_dim, key, *, use_bf16_mxu=True):
        self.output_dim = output_dim
        self.use_bf16_mxu = use_bf16_mxu

        gen = _tpu_generation()
        # v5e MXU is 128-wide; v6e/v7x are 256-wide -> larger batch tiles pay off.
        self.tm_cap = 128 if gen == 5 else 256
        # v7x has two TensorCores per chip: make the parallel axis >= 2 steps.
        self.ensure_two_steps = gen >= 7
        # Per-TC VMEM ceiling (leave headroom): 64 MiB on v7x, 128 MiB otherwise.
        self.vmem_cap_bytes = (56 << 20) if gen >= 7 else (100 << 20)
        # bf16 inter-layer carry where the VPU is bf16-capable (v6e/v7x/unknown).
        self.carry_dtype = (
            jnp.bfloat16 if (use_bf16_mxu and gen != 5) else jnp.float32
        )

        dims = [input_dim] + list(hidden_dims) + [output_dim]
        self.dims = dims
        # Input feature dim left unpadded (full-dim block is legal); hidden and
        # output dims lane-padded to multiples of 128 (lane-dense stores, full
        # MXU tiles). Zero padding is mathematically transparent.
        self.dims_pad = [input_dim] + [_round_up(d, _LANE) for d in dims[1:]]

        w_dtype = jnp.bfloat16 if use_bf16_mxu else jnp.float32

        self.weights = []      # padded, kernel-facing (bf16 or f32)
        self.biases = []       # padded, f32 (f32 epilogue in the kernel)
        self.weights_ref = []  # unpadded f32, for the pure-JAX references
        self.biases_ref = []

        for layer in range(len(dims) - 1):
            in_d, out_d = dims[layer], dims[layer + 1]
            key, kw, kb = jax.random.split(key, 3)
            # Deterministic init mimicking nn.Linear: U(-1/sqrt(in), 1/sqrt(in)).
            bound = 1.0 / (in_d ** 0.5)
            w = jax.random.uniform(kw, (in_d, out_d), jnp.float32, -bound, bound)
            b = jax.random.uniform(kb, (out_d,), jnp.float32, -bound, bound)
            self.weights_ref.append(w)
            self.biases_ref.append(b)

            kp_, np_ = self.dims_pad[layer], self.dims_pad[layer + 1]
            wp = jnp.zeros((kp_, np_), jnp.float32).at[:in_d, :out_d].set(w)
            bp = jnp.zeros((1, np_), jnp.float32).at[0, :out_d].set(b)
            self.weights.append(wp.astype(w_dtype))
            self.biases.append(bp)

    def __call__(self, x):
        return fused_mlp(
            x,
            self.weights,
            self.biases,
            self.dims_pad,
            self.output_dim,
            use_bf16_mxu=self.use_bf16_mxu,
            carry_dtype=self.carry_dtype,
            tm_cap=self.tm_cap,
            ensure_two_steps=self.ensure_two_steps,
            vmem_cap_bytes=self.vmem_cap_bytes,
        )

    def reference(self, x):
        """Pure-f32 reference (matches the PyTorch module in exact arithmetic)."""
        y = x
        n = len(self.weights_ref)
        for i, (w, b) in enumerate(zip(self.weights_ref, self.biases_ref)):
            y = y @ w + b[None, :]
            if i < n - 1:
                y = jnp.maximum(y, 0.0)
        return y

    def reference_kernel_numerics(self, x):
        """Reference with the exact same dtype chain as the kernel."""
        y = x.astype(jnp.float32)
        n = len(self.weights_ref)
        for i, (w, b) in enumerate(zip(self.weights_ref, self.biases_ref)):
            lhs = y.astype(jnp.bfloat16) if self.use_bf16_mxu else y
            rhs = w.astype(jnp.bfloat16) if self.use_bf16_mxu else w
            y = jnp.dot(lhs, rhs, preferred_element_type=jnp.float32) + b[None, :]
            if i < n - 1:
                y = jnp.maximum(y, 0.0).astype(self.carry_dtype)
        return y.astype(jnp.float32)


if __name__ == "__main__":
    key = jax.random.PRNGKey(0)
    key, kx, kx2, kp = jax.random.split(key, 4)

    batch = 8
    input_dim = 32
    hidden_dims = [64, 64]
    output_dim = 16

    x = jax.random.normal(kx, (batch, input_dim), jnp.float32)

    # --- f32 path (tight tolerance against exact reference) ----------------
    mlp_f32 = PallasMLP(input_dim, hidden_dims, output_dim, kp, use_bf16_mxu=False)
    y = mlp_f32(x)
    jax.block_until_ready(y)
    assert y.shape == (batch, output_dim)
    assert jnp.allclose(y, mlp_f32.reference(x), atol=1e-5, rtol=1e-5), \
        "f32 path mismatch"

    # --- default bf16-MXU path vs a reference with the same dtype chain ----
    mlp = PallasMLP(input_dim, hidden_dims, output_dim, kp)  # bf16 by default
    yb = mlp(x)
    jax.block_until_ready(yb)
    refb = mlp.reference_kernel_numerics(x)
    assert jnp.allclose(yb, refb, atol=1e-3, rtol=1e-3), "bf16 path mismatch"

    # --- larger batch: batch padding, tile selection, multi-step grid ------
    big_batch = 300
    xb = jax.random.normal(kx2, (big_batch, input_dim), jnp.float32)
    yb2 = mlp(xb)
    jax.block_until_ready(yb2)
    refb2 = mlp.reference_kernel_numerics(xb)
    assert yb2.shape == (big_batch, output_dim)
    assert jnp.allclose(yb2, refb2, atol=1e-3, rtol=1e-3), \
        "batched bf16 path mismatch"
    # Sanity vs the exact f32 reference (bf16 rounding only).
    assert jnp.allclose(yb2, mlp.reference(xb), atol=3e-2, rtol=3e-2), \
        "bf16 path too far from f32 reference"

    print("KERNEL_OK")
</pallas_src>

<mosaic_0001>
module attributes {stable_mosaic.version = 11 : i64} {
  func.func @_fused_mlp_kernel(%arg0: i32, %arg1: memref<8x32xf32, #tpu.memory_space<vmem>>, %arg2: memref<32x128xf32, #tpu.memory_space<vmem>>, %arg3: memref<1x128xf32, #tpu.memory_space<vmem>>, %arg4: memref<128x128xf32, #tpu.memory_space<vmem>>, %arg5: memref<1x128xf32, #tpu.memory_space<vmem>>, %arg6: memref<128x128xf32, #tpu.memory_space<vmem>>, %arg7: memref<1x128xf32, #tpu.memory_space<vmem>>, %arg8: memref<8x128xf32, #tpu.memory_space<vmem>>) attributes {dimension_semantics = [#tpu.dimension_semantics<parallel>], iteration_bounds = array<i64: 1>, scalar_prefetch = 0 : i64, scratch_operands = 0 : i64, tpu.core_type = #tpu.core_type<tc>, window_params = [{transform_indices = @transform_0, window_bounds = array<i64: 8, 32>}, {pipeline_mode = #tpu.pipeline_mode<synchronous>, transform_indices = @transform_1, window_bounds = array<i64: 32, 128>}, {pipeline_mode = #tpu.pipeline_mode<synchronous>, transform_indices = @transform_2, window_bounds = array<i64: 1, 128>}, {pipeline_mode = #tpu.pipeline_mode<synchronous>, transform_indices = @transform_3, window_bounds = array<i64: 128, 128>}, {pipeline_mode = #tpu.pipeline_mode<synchronous>, transform_indices = @transform_4, window_bounds = array<i64: 1, 128>}, {pipeline_mode = #tpu.pipeline_mode<synchronous>, transform_indices = @transform_5, window_bounds = array<i64: 128, 128>}, {pipeline_mode = #tpu.pipeline_mode<synchronous>, transform_indices = @transform_6, window_bounds = array<i64: 1, 128>}, {transform_indices = @transform_7, window_bounds = array<i64: 8, 128>}]} {
    %c0 = arith.constant 0 : index
    %c0_0 = arith.constant 0 : index
    %0 = vector.load %arg1[%c0, %c0_0] : memref<8x32xf32, #tpu.memory_space<vmem>>, vector<8x32xf32>
    %c0_1 = arith.constant 0 : index
    %c0_2 = arith.constant 0 : index
    %1 = vector.load %arg2[%c0_1, %c0_2] : memref<32x128xf32, #tpu.memory_space<vmem>>, vector<32x128xf32>
    %c0_3 = arith.constant 0 : index
    %c0_4 = arith.constant 0 : index
    %2 = vector.load %arg3[%c0_3, %c0_4] : memref<1x128xf32, #tpu.memory_space<vmem>>, vector<1x128xf32>
    %cst = arith.constant dense<0.000000e+00> : vector<8x128xf32>
    %3 = tpu.matmul %0, %1, %cst {dimension_numbers = #tpu.dot_dimension_numbers<[1], [0], [0], [1], [0, 0, 1, 1], [], []>} : vector<8x32xf32>, vector<32x128xf32>, vector<8x128xf32> -> vector<8x128xf32>
    %4 = vector.broadcast %2 : vector<1x128xf32> to vector<8x128xf32>
    %5 = arith.addf %3, %4 : vector<8x128xf32>
    %cst_5 = arith.constant 0.000000e+00 : f32
    %6 = vector.broadcast %cst_5 : f32 to vector<8x128xf32>
    %7 = arith.maximumf %5, %6 : vector<8x128xf32>
    %c0_6 = arith.constant 0 : index
    %c0_7 = arith.constant 0 : index
    %8 = vector.load %arg4[%c0_6, %c0_7] : memref<128x128xf32, #tpu.memory_space<vmem>>, vector<128x128xf32>
    %c0_8 = arith.constant 0 : index
    %c0_9 = arith.constant 0 : index
    %9 = vector.load %arg5[%c0_8, %c0_9] : memref<1x128xf32, #tpu.memory_space<vmem>>, vector<1x128xf32>
    %cst_10 = arith.constant dense<0.000000e+00> : vector<8x128xf32>
    %10 = tpu.matmul %7, %8, %cst_10 {dimension_numbers = #tpu.dot_dimension_numbers<[1], [0], [0], [1], [0, 0, 1, 1], [], []>} : vector<8x128xf32>, vector<128x128xf32>, vector<8x128xf32> -> vector<8x128xf32>
    %11 = vector.broadcast %9 : vector<1x128xf32> to vector<8x128xf32>
    %12 = arith.addf %10, %11 : vector<8x128xf32>
    %cst_11 = arith.constant 0.000000e+00 : f32
    %13 = vector.broadcast %cst_11 : f32 to vector<8x128xf32>
    %14 = arith.maximumf %12, %13 : vector<8x128xf32>
    %c0_12 = arith.constant 0 : index
    %c0_13 = arith.constant 0 : index
    %15 = vector.load %arg6[%c0_12, %c0_13] : memref<128x128xf32, #tpu.memory_space<vmem>>, vector<128x128xf32>
    %c0_14 = arith.constant 0 : index
    %c0_15 = arith.constant 0 : index
    %16 = vector.load %arg7[%c0_14, %c0_15] : memref<1x128xf32, #tpu.memory_space<vmem>>, vector<1x128xf32>
    %cst_16 = arith.constant dense<0.000000e+00> : vector<8x128xf32>
    %17 = tpu.matmul %14, %15, %cst_16 {dimension_numbers = #tpu.dot_dimension_numbers<[1], [0], [0], [1], [0, 0, 1, 1], [], []>} : vector<8x128xf32>, vector<128x128xf32>, vector<8x128xf32> -> vector<8x128xf32>
    %18 = vector.broadcast %16 : vector<1x128xf32> to vector<8x128xf32>
    %19 = arith.addf %17, %18 : vector<8x128xf32>
    %c0_17 = arith.constant 0 : index
    %c0_18 = arith.constant 0 : index
    %20 = vector.load %arg8[%c0_17, %c0_18] : memref<8x128xf32, #tpu.memory_space<vmem>>, vector<8x128xf32>
    tpu.vector_store %arg8[%c0_17, %c0_18], %19 {strides = array<i32>} : memref<8x128xf32, #tpu.memory_space<vmem>>, vector<8x128xf32>,
    return
  }
  func.func @transform_0(%arg0: i32) -> (i32, i32) {
    %c0_i32 = arith.constant 0 : i32
    %c0_i32_0 = arith.constant 0 : i32
    return %arg0, %c0_i32 : i32, i32
  }
  func.func @transform_1(%arg0: i32) -> (i32, i32) {
    %c0_i32 = arith.constant 0 : i32
    %c0_i32_0 = arith.constant 0 : i32
    %c0_i32_1 = arith.constant 0 : i32
    return %c0_i32, %c0_i32_0 : i32, i32
  }
  func.func @transform_2(%arg0: i32) -> (i32, i32) {
    %c0_i32 = arith.constant 0 : i32
    %c0_i32_0 = arith.constant 0 : i32
    %c0_i32_1 = arith.constant 0 : i32
    return %c0_i32, %c0_i32_0 : i32, i32
  }
  func.func @transform_3(%arg0: i32) -> (i32, i32) {
    %c0_i32 = arith.constant 0 : i32
    %c0_i32_0 = arith.constant 0 : i32
    %c0_i32_1 = arith.constant 0 : i32
    return %c0_i32, %c0_i32_0 : i32, i32
  }
  func.func @transform_4(%arg0: i32) -> (i32, i32) {
    %c0_i32 = arith.constant 0 : i32
    %c0_i32_0 = arith.constant 0 : i32
    %c0_i32_1 = arith.constant 0 : i32
    return %c0_i32, %c0_i32_0 : i32, i32
  }
  func.func @transform_5(%arg0: i32) -> (i32, i32) {
    %c0_i32 = arith.constant 0 : i32
    %c0_i32_0 = arith.constant 0 : i32
    %c0_i32_1 = arith.constant 0 : i32
    return %c0_i32, %c0_i32_0 : i32, i32
  }
  func.func @transform_6(%arg0: i32) -> (i32, i32) {
    %c0_i32 = arith.constant 0 : i32
    %c0_i32_0 = arith.constant 0 : i32
    %c0_i32_1 = arith.constant 0 : i32
    return %c0_i32, %c0_i32_0 : i32, i32
  }
  func.func @transform_7(%arg0: i32) -> (i32, i32) {
    %c0_i32 = arith.constant 0 : i32
    %c0_i32_0 = arith.constant 0 : i32
    return %arg0, %c0_i32 : i32, i32
  }
}

</mosaic_0001>

<llo_original>
// kernel: tpu_custom_call.1
$region0: #{tpu_custom_call.1}
  #allocation0 [shape = 'u32[]', space=smem, size = 0x4, offset = 0x4, fixed_abs, tag = 'smem constant byte address 0x4 - core index']
  #allocation1 [shape = 'u32[144,128]{1,0:T(1,128)}', space=vmem, size = 0x12000, scoped, tag = 'internal scratch']
  %s0 = inlined_call_operand.hbm [shape: f32[8,32], index: 0, kind: input, shape index: {}]
  %s1 = inlined_call_operand.hbm [shape: f32[32,128], index: 1, kind: input, shape index: {}]
  %s2 = inlined_call_operand.vmem [shape: f32[1,128], index: 2, kind: input, shape index: {}]
  %s3 = inlined_call_operand.hbm [shape: f32[128,128], index: 3, kind: input, shape index: {}]
  %s4 = inlined_call_operand.vmem [shape: f32[1,128], index: 4, kind: input, shape index: {}]
  %s5 = inlined_call_operand.hbm [shape: f32[128,128], index: 5, kind: input, shape index: {}]
  %s6 = inlined_call_operand.vmem [shape: f32[1,128], index: 6, kind: input, shape index: {}]
  %s7 = inlined_call_operand.hbm [shape: f32[8,128], index: 7, kind: output, shape index: {}]
  %s8 = sld [smem:[#allocation0]]
  $region54: #{tpu_custom_call.1} parent=0
    _
  %s10 = ssub.s32 1, %s8
  %s11 = scalar_select 0, %s10, %s8
  $region1: #{tpu_custom_call.1} parent=0
    #allocation2 [shape = 'u8[4096]{0}', space=vmem, size = 0x1000, scoped, tag = 'input window, operand 0, single buffered']
    #allocation3 [shape = 's32[1]{0}', space=sflag, size = 0x4, scoped, tag = 'scoped memory for tpu_custom_call.1']
    #allocation4 [shape = 's32[1]{0}', space=sflag, size = 0x4, scoped, tag = 'scoped memory for tpu_custom_call.1']
    #allocation5 [shape = 'u8[16384]{0}', space=vmem, size = 0x4000, scoped, tag = 'input window, operand 1, single buffered']
    #allocation6 [shape = 's32[1]{0}', space=sflag, size = 0x4, scoped, tag = 'scoped memory for tpu_custom_call.1']
    #allocation7 [shape = 'u8[65536]{0}', space=vmem, size = 0x10000, scoped, tag = 'input window, operand 3, single buffered']
    #allocation8 [shape = 'u8[65536]{0}', space=vmem, size = 0x10000, scoped, tag = 'input window, operand 5, single buffered']
    #allocation9 [shape = 's32[1]{0}', space=sflag, size = 0x4, scoped, tag = 'scoped memory for tpu_custom_call.1']
    #allocation10 [shape = 'u8[4096]{0}', space=vmem, size = 0x1000, scoped, tag = 'output window, operand 0, single buffered']
    %12 = vsyncpa [#allocation3], 0
    %13 = vsyncpa [#allocation6], 0
    %14 = vsyncpa [#allocation9], 0
    %15 = vsyncpa [#allocation4], 0
    // Predicated region
    $region2: #{tpu_custom_call.1} parent=1 // pred_check
      _
    $region3: #{tpu_custom_call.1} parent=1 // pred_check_branch
      %17 = sbr.rel (0) target = $region5
    $region4: #{tpu_custom_call.1} parent=1 // pred_region
      %s19 = ssub.s32 128, 128
      %20 = vsyncadd [#allocation3], %s19
      %s22 = sshll.u32 [#allocation2], 4
      %s23 = int_to_ptr.vmem [resolvable:$true] %s22
      %25 = dma.hbm_to_vmem [thread:$0]  %s0, 128, %s23, [#allocation3]
    $region5: #{tpu_custom_call.1} parent=1 // pred_fallthru
      _
    // Predicated region
    $region6: #{tpu_custom_call.1} parent=1 // pred_check
      _
    $region7: #{tpu_custom_call.1} parent=1 // pred_check_branch
      %27 = sbr.rel (0) target = $region9
    $region8: #{tpu_custom_call.1} parent=1 // pred_region
      %s29 = ssub.s32 512, 512
      %30 = vsyncadd [#allocation6], %s29
      %s31 = sshll.u32 [#allocation5], 4
      %s32 = int_to_ptr.vmem [resolvable:$true] %s31
      %37 = dma.hbm_to_vmem [thread:$0]  %s1, 512, %s32, [#allocation6], 128, 128, 8
    $region9: #{tpu_custom_call.1} parent=1 // pred_fallthru
      _
    // Predicated region
    $region10: #{tpu_custom_call.1} parent=1 // pred_check
      _
    $region11: #{tpu_custom_call.1} parent=1 // pred_check_branch
      %39 = sbr.rel (0) target = $region13
    $region12: #{tpu_custom_call.1} parent=1 // pred_region
      _
    $region13: #{tpu_custom_call.1} parent=1 // pred_fallthru
      _
    // Predicated region
    $region14: #{tpu_custom_call.1} parent=1 // pred_check
      _
    $region15: #{tpu_custom_call.1} parent=1 // pred_check_branch
      %41 = sbr.rel (0) target = $region17
    $region16: #{tpu_custom_call.1} parent=1 // pred_region
      %s43 = ssub.s32 2048, 2048
      %44 = vsyncadd [#allocation6], %s43
      %s45 = sshll.u32 [#allocation7], 4
      %s46 = int_to_ptr.vmem [resolvable:$true] %s45
      %51 = dma.hbm_to_vmem [thread:$0]  %s3, 2048, %s46, [#allocation6], 128, 128, 8
    $region17: #{tpu_custom_call.1} parent=1 // pred_fallthru
      _
    // Predicated region
    $region18: #{tpu_custom_call.1} parent=1 // pred_check
      _
    $region19: #{tpu_custom_call.1} parent=1 // pred_check_branch
      %53 = sbr.rel (0) target = $region21
    $region20: #{tpu_custom_call.1} parent=1 // pred_region
      _
    $region21: #{tpu_custom_call.1} parent=1 // pred_fallthru
      _
    // Predicated region
    $region22: #{tpu_custom_call.1} parent=1 // pred_check
      _
    $region23: #{tpu_custom_call.1} parent=1 // pred_check_branch
      %55 = sbr.rel (0) target = $region25
    $region24: #{tpu_custom_call.1} parent=1 // pred_region
      %s57 = ssub.s32 2048, 2048
      %58 = vsyncadd [#allocation9], %s57
      %s59 = sshll.u32 [#allocation8], 4
      %s60 = int_to_ptr.vmem [resolvable:$true] %s59
      %65 = dma.hbm_to_vmem [thread:$0]  %s5, 2048, %s60, [#allocation9], 128, 128, 8
    $region25: #{tpu_custom_call.1} parent=1 // pred_fallthru
      _
    // Predicated region
    $region26: #{tpu_custom_call.1} parent=1 // pred_check
      _
    $region27: #{tpu_custom_call.1} parent=1 // pred_check_branch
      %67 = sbr.rel (0) target = $region29
    $region28: #{tpu_custom_call.1} parent=1 // pred_region
      _
    $region29: #{tpu_custom_call.1} parent=1 // pred_fallthru
      _
    // Predicated region
    $region30: #{tpu_custom_call.1} parent=1 // pred_check
      _
    $region31: #{tpu_custom_call.1} parent=1 // pred_check_branch
      %69 = sbr.rel (0) target = $region33
    $region32: #{tpu_custom_call.1} parent=1 // pred_region
      %70 = dma.done [#allocation3], 128
    $region33: #{tpu_custom_call.1} parent=1 // pred_fallthru
      _
    // Predicated region
    $region34: #{tpu_custom_call.1} parent=1 // pred_check
      _
    $region35: #{tpu_custom_call.1} parent=1 // pred_check_branch
      %72 = sbr.rel (0) target = $region37
    $region36: #{tpu_custom_call.1} parent=1 // pred_region
      %73 = dma.done [#allocation6], 512
    $region37: #{tpu_custom_call.1} parent=1 // pred_fallthru
      _
    // Predicated region
    $region38: #{tpu_custom_call.1} parent=1 // pred_check
      _
    $region39: #{tpu_custom_call.1} parent=1 // pred_check_branch
      %75 = sbr.rel (0) target = $region41
    $region40: #{tpu_custom_call.1} parent=1 // pred_region
      %76 = dma.done [#allocation6], 2048
    $region41: #{tpu_custom_call.1} parent=1 // pred_fallthru
      _
    // Predicated region
    $region42: #{tpu_custom_call.1} parent=1 // pred_check
      _
    $region43: #{tpu_custom_call.1} parent=1 // pred_check_branch
      %78 = sbr.rel (0) target = $region45
    $region44: #{tpu_custom_call.1} parent=1 // pred_region
      %79 = dma.done [#allocation9], 2048
    $region45: #{tpu_custom_call.1} parent=1 // pred_fallthru
      _
    %v80 = vld [vmem:[#allocation2] sm:$0xff]
    %v81 = vld [vmem:[#allocation5] sm:$0xff]
    %v82 = vld [vmem:[#allocation5 + $0x8] sm:$0xff]
    %v83 = vld [vmem:[#allocation5 + $0x10] sm:$0xff]
    %v84 = vld [vmem:[#allocation5 + $0x18] sm:$0xff]
    %v85 = vld [vmem:[%s2] sm:$0x1]
    %v87 = vlaneseq
    %v88 = vshrl.u32 %v87, 7
    %v89 = vsub.s32 0, %v88
    %v90 = vrot.slane %v85, %v89
    %vm92 = vcmask 261120
    %v94 = vsel %vm92, %v80, 0
    %96 = vmatprep.subr.mxu0 0.0
    %97 = vmatpush1.msra.mxu0 %v81
    %98 = vmatprep.subr.mxu0 0.0
    %99 = vmatpush1.msra.mxu0 %v82
    %100 = vmatprep.subr.mxu0 0.0
    %101 = vmatpush1.msra.mxu0 %v83
    %102 = vmatprep.subr.mxu0 0.0
    %103 = vmatpush1.msra.mxu0 %v84
    %104 = vmatprep.subr.mxu0 0.0
    %105 = vmatpush1.msra.mxu0 0.0
    %106 = vmatprep.subr.mxu0 0.0
    %107 = vmatpush1.msra.mxu0 0.0
    %108 = vmatprep.subr.mxu0 0.0
    %109 = vmatpush1.msra.mxu0 0.0
    %110 = vmatprep.subr.mxu0 0.0
    %111 = vmatpush1.msra.mxu0 0.0
    %112 = vmatprep.subr.mxu0 0.0
    %113 = vmatpush1.msra.mxu0 0.0
    %114 = vmatprep.subr.mxu0 0.0
    %115 = vmatpush1.msra.mxu0 0.0
    %116 = vmatprep.subr.mxu0 0.0
    %117 = vmatpush1.msra.mxu0 0.0
    %118 = vmatprep.subr.mxu0 0.0
    %119 = vmatpush1.msra.mxu0 0.0
    %120 = vmatprep.subr.mxu0 0.0
    %121 = vmatpush1.msra.mxu0 0.0
    %122 = vmatprep.subr.mxu0 0.0
    %123 = vmatpush1.msra.mxu0 0.0
    %124 = vmatprep.subr.mxu0 0.0
    %125 = vmatpush1.msra.mxu0 0.0
    %126 = vmatprep.subr.mxu0 0.0
    %127 = vmatpush1.msra.mxu0 0.0
    %128 = vmatprep.subr.mxu0 0.0
    %129 = vmatpush1.msra.mxu0 0.0
    %130 = vmatprep.subr.mxu0 0.0
    %131 = vmatpush1.msra.mxu0 0.0
    %132 = vmatprep.subr.mxu0 0.0
    %133 = vmatpush1.msra.mxu0 0.0
    %134 = vmatprep.subr.mxu0 0.0
    %135 = vmatpush1.msra.mxu0 0.0
    %136 = vmatprep.subr.mxu0 0.0
    %137 = vmatpush1.msra.mxu0 0.0
    %138 = vmatprep.subr.mxu0 0.0
    %139 = vmatpush1.msra.mxu0 0.0
    %140 = vmatprep.subr.mxu0 0.0
    %141 = vmatpush1.msra.mxu0 0.0
    %142 = vmatprep.subr.mxu0 0.0
    %143 = vmatpush1.msra.mxu0 0.0
    %144 = vmatprep.subr.mxu0 0.0
    %145 = vmatpush1.msra.mxu0 0.0
    %146 = vmatprep.subr.mxu0 0.0
    %147 = vmatpush1.msra.mxu0 0.0
    %148 = vmatprep.subr.mxu0 0.0
    %149 = vmatpush1.msra.mxu0 0.0
    %150 = vmatprep.subr.mxu0 0.0
    %151 = vmatpush1.msra.mxu0 0.0
    %152 = vmatprep.subr.mxu0 0.0
    %153 = vmatpush1.msra.mxu0 0.0
    %154 = vmatprep.subr.mxu0 0.0
    %155 = vmatpush1.msra.mxu0 0.0
    %156 = vmatprep.subr.mxu0 0.0
    %157 = vmatpush1.msra.mxu0 0.0
    %158 = vmatprep.subr.mxu0 0.0
    %159 = vmatpush1.msra.mxu0 0.0
    %160 = vmatprep.mubr.f32.mxu0 0.0
    %161 = vmatmul.mubr.f32.gmra.mrb[0].mxu0 %v94
    %v162 = vpop.f32.mrb[0].mxu0
    %v163 = vadd.f32 %v90, %v162
    %v164 = vpop.f32.mrb[0].mxu0
    %165 = vdwg.mxu0
    %v166 = vmax.f32 %v163, 0.0
    %v167 = vld [vmem:[#allocation7] sm:$0xff]
    %v168 = vld [vmem:[#allocation7 + $0x8] sm:$0xff]
    %v169 = vld [vmem:[#allocation7 + $0x10] sm:$0xff]
    %v170 = vld [vmem:[#allocation7 + $0x18] sm:$0xff]
    %v171 = vld [vmem:[#allocation7 + $0x20] sm:$0xff]
    %v172 = vld [vmem:[#allocation7 + $0x28] sm:$0xff]
    %v173 = vld [vmem:[#allocation7 + $0x30] sm:$0xff]
    %v174 = vld [vmem:[#allocation7 + $0x38] sm:$0xff]
    %v175 = vld [vmem:[#allocation7 + $0x40] sm:$0xff]
    %v176 = vld [vmem:[#allocation7 + $0x48] sm:$0xff]
    %v177 = vld [vmem:[#allocation7 + $0x50] sm:$0xff]
    %v178 = vld [vmem:[#allocation7 + $0x58] sm:$0xff]
    %v179 = vld [vmem:[#allocation7 + $0x60] sm:$0xff]
    %v180 = vld [vmem:[#allocation7 + $0x68] sm:$0xff]
    %v181 = vld [vmem:[#allocation7 + $0x70] sm:$0xff]
    %v182 = vld [vmem:[#allocation7 + $0x78] sm:$0xff]
    %v183 = vld [vmem:[%s4] sm:$0x1]
    %v185 = vlaneseq
    %v186 = vshrl.u32 %v185, 7
    %v187 = vsub.s32 0, %v186
    %v188 = vrot.slane %v183, %v187
    %190 = vmatprep.subr.mxu0 0.0
    %191 = vmatpush1.msra.mxu0 %v167
    %192 = vmatprep.subr.mxu0 0.0
    %193 = vmatpush1.msra.mxu0 %v168
    %194 = vmatprep.subr.mxu0 0.0
    %195 = vmatpush1.msra.mxu0 %v169
    %196 = vmatprep.subr.mxu0 0.0
    %197 = vmatpush1.msra.mxu0 %v170
    %198 = vmatprep.subr.mxu0 0.0
    %199 = vmatpush1.msra.mxu0 %v171
    %200 = vmatprep.subr.mxu0 0.0
    %201 = vmatpush1.msra.mxu0 %v172
    %202 = vmatprep.subr.mxu0 0.0
    %203 = vmatpush1.msra.mxu0 %v173
    %204 = vmatprep.subr.mxu0 0.0
    %205 = vmatpush1.msra.mxu0 %v174
    %206 = vmatprep.subr.mxu0 0.0
    %207 = vmatpush1.msra.mxu0 %v175
    %208 = vmatprep.subr.mxu0 0.0
    %209 = vmatpush1.msra.mxu0 %v176
    %210 = vmatprep.subr.mxu0 0.0
    %211 = vmatpush1.msra.mxu0 %v177
    %212 = vmatprep.subr.mxu0 0.0
    %213 = vmatpush1.msra.mxu0 %v178
    %214 = vmatprep.subr.mxu0 0.0
    %215 = vmatpush1.msra.mxu0 %v179
    %216 = vmatprep.subr.mxu0 0.0
    %217 = vmatpush1.msra.mxu0 %v180
    %218 = vmatprep.subr.mxu0 0.0
    %219 = vmatpush1.msra.mxu0 %v181
    %220 = vmatprep.subr.mxu0 0.0
    %221 = vmatpush1.msra.mxu0 %v182
    %222 = vmatprep.subr.mxu0 0.0
    %223 = vmatpush1.msra.mxu0 0.0
    %224 = vmatprep.subr.mxu0 0.0
    %225 = vmatpush1.msra.mxu0 0.0
    %226 = vmatprep.subr.mxu0 0.0
    %227 = vmatpush1.msra.mxu0 0.0
    %228 = vmatprep.subr.mxu0 0.0
    %229 = vmatpush1.msra.mxu0 0.0
    %230 = vmatprep.subr.mxu0 0.0
    %231 = vmatpush1.msra.mxu0 0.0
    %232 = vmatprep.subr.mxu0 0.0
    %233 = vmatpush1.msra.mxu0 0.0
    %234 = vmatprep.subr.mxu0 0.0
    %235 = vmatpush1.msra.mxu0 0.0
    %236 = vmatprep.subr.mxu0 0.0
    %237 = vmatpush1.msra.mxu0 0.0
    %238 = vmatprep.subr.mxu0 0.0
    %239 = vmatpush1.msra.mxu0 0.0
    %240 = vmatprep.subr.mxu0 0.0
    %241 = vmatpush1.msra.mxu0 0.0
    %242 = vmatprep.subr.mxu0 0.0
    %243 = vmatpush1.msra.mxu0 0.0
    %244 = vmatprep.subr.mxu0 0.0
    %245 = vmatpush1.msra.mxu0 0.0
    %246 = vmatprep.subr.mxu0 0.0
    %247 = vmatpush1.msra.mxu0 0.0
    %248 = vmatprep.subr.mxu0 0.0
    %249 = vmatpush1.msra.mxu0 0.0
    %250 = vmatprep.subr.mxu0 0.0
    %251 = vmatpush1.msra.mxu0 0.0
    %252 = vmatprep.subr.mxu0 0.0
    %253 = vmatpush1.msra.mxu0 0.0
    %254 = vmatprep.mubr.f32.mxu0 0.0
    %255 = vmatmul.mubr.f32.gmra.mrb[0].mxu0 %v166
    %v256 = vpop.f32.mrb[0].mxu0
    %v257 = vadd.f32 %v188, %v256
    %v258 = vpop.f32.mrb[0].mxu0
    %259 = vdwg.mxu0
    %v260 = vmax.f32 %v257, 0.0
    %v261 = vld [vmem:[#allocation8] sm:$0xff]
    %v262 = vld [vmem:[#allocation8 + $0x8] sm:$0xff]
    %v263 = vld [vmem:[#allocation8 + $0x10] sm:$0xff]
    %v264 = vld [vmem:[#allocation8 + $0x18] sm:$0xff]
    %v265 = vld [vmem:[#allocation8 + $0x20] sm:$0xff]
    %v266 = vld [vmem:[#allocation8 + $0x28] sm:$0xff]
    %v267 = vld [vmem:[#allocation8 + $0x30] sm:$0xff]
    %v268 = vld [vmem:[#allocation8 + $0x38] sm:$0xff]
    %v269 = vld [vmem:[#allocation8 + $0x40] sm:$0xff]
    %v270 = vld [vmem:[#allocation8 + $0x48] sm:$0xff]
    %v271 = vld [vmem:[#allocation8 + $0x50] sm:$0xff]
    %v272 = vld [vmem:[#allocation8 + $0x58] sm:$0xff]
    %v273 = vld [vmem:[#allocation8 + $0x60] sm:$0xff]
    %v274 = vld [vmem:[#allocation8 + $0x68] sm:$0xff]
    %v275 = vld [vmem:[#allocation8 + $0x70] sm:$0xff]
    %v276 = vld [vmem:[#allocation8 + $0x78] sm:$0xff]
    %v277 = vld [vmem:[%s6] sm:$0x1]
    %v279 = vlaneseq
    %v280 = vshrl.u32 %v279, 7
    %v281 = vsub.s32 0, %v280
    %v282 = vrot.slane %v277, %v281
    %284 = vmatprep.subr.mxu0 0.0
    %285 = vmatpush1.msra.mxu0 %v261
    %286 = vmatprep.subr.mxu0 0.0
    %287 = vmatpush1.msra.mxu0 %v262
    %288 = vmatprep.subr.mxu0 0.0
    %289 = vmatpush1.msra.mxu0 %v263
    %290 = vmatprep.subr.mxu0 0.0
    %291 = vmatpush1.msra.mxu0 %v264
    %292 = vmatprep.subr.mxu0 0.0
    %293 = vmatpush1.msra.mxu0 %v265
    %294 = vmatprep.subr.mxu0 0.0
    %295 = vmatpush1.msra.mxu0 %v266
    %296 = vmatprep.subr.mxu0 0.0
    %297 = vmatpush1.msra.mxu0 %v267
    %298 = vmatprep.subr.mxu0 0.0
    %299 = vmatpush1.msra.mxu0 %v268
    %300 = vmatprep.subr.mxu0 0.0
    %301 = vmatpush1.msra.mxu0 %v269
    %302 = vmatprep.subr.mxu0 0.0
    %303 = vmatpush1.msra.mxu0 %v270
    %304 = vmatprep.subr.mxu0 0.0
    %305 = vmatpush1.msra.mxu0 %v271
    %306 = vmatprep.subr.mxu0 0.0
    %307 = vmatpush1.msra.mxu0 %v272
    %308 = vmatprep.subr.mxu0 0.0
    %309 = vmatpush1.msra.mxu0 %v273
    %310 = vmatprep.subr.mxu0 0.0
    %311 = vmatpush1.msra.mxu0 %v274
    %312 = vmatprep.subr.mxu0 0.0
    %313 = vmatpush1.msra.mxu0 %v275
    %314 = vmatprep.subr.mxu0 0.0
    %315 = vmatpush1.msra.mxu0 %v276
    %316 = vmatprep.subr.mxu0 0.0
    %317 = vmatpush1.msra.mxu0 0.0
    %318 = vmatprep.subr.mxu0 0.0
    %319 = vmatpush1.msra.mxu0 0.0
    %320 = vmatprep.subr.mxu0 0.0
    %321 = vmatpush1.msra.mxu0 0.0
    %322 = vmatprep.subr.mxu0 0.0
    %323 = vmatpush1.msra.mxu0 0.0
    %324 = vmatprep.subr.mxu0 0.0
    %325 = vmatpush1.msra.mxu0 0.0
    %326 = vmatprep.subr.mxu0 0.0
    %327 = vmatpush1.msra.mxu0 0.0
    %328 = vmatprep.subr.mxu0 0.0
    %329 = vmatpush1.msra.mxu0 0.0
    %330 = vmatprep.subr.mxu0 0.0
    %331 = vmatpush1.msra.mxu0 0.0
    %332 = vmatprep.subr.mxu0 0.0
    %333 = vmatpush1.msra.mxu0 0.0
    %334 = vmatprep.subr.mxu0 0.0
    %335 = vmatpush1.msra.mxu0 0.0
    %336 = vmatprep.subr.mxu0 0.0
    %337 = vmatpush1.msra.mxu0 0.0
    %338 = vmatprep.subr.mxu0 0.0
    %339 = vmatpush1.msra.mxu0 0.0
    %340 = vmatprep.subr.mxu0 0.0
    %341 = vmatpush1.msra.mxu0 0.0
    %342 = vmatprep.subr.mxu0 0.0
    %343 = vmatpush1.msra.mxu0 0.0
    %344 = vmatprep.subr.mxu0 0.0
    %345 = vmatpush1.msra.mxu0 0.0
    %346 = vmatprep.subr.mxu0 0.0
    %347 = vmatpush1.msra.mxu0 0.0
    %348 = vmatprep.mubr.f32.mxu0 0.0
    %349 = vmatmul.mubr.f32.gmra.mrb[0].mxu0 %v260
    %v350 = vpop.f32.mrb[0].mxu0
    %v351 = vadd.f32 %v282, %v350
    %v352 = vpop.f32.mrb[0].mxu0
    %353 = vdwg.mxu0
    %354 = vst [vmem:[#allocation10] sm:$0xff] %v351
    // Predicated region
    $region46: #{tpu_custom_call.1} parent=1 // pred_check
      _
    $region47: #{tpu_custom_call.1} parent=1 // pred_check_branch
      %356 = sbr.rel (0) target = $region49
    $region48: #{tpu_custom_call.1} parent=1 // pred_region
      %s358 = ssub.s32 128, 128
      %359 = vsyncadd [#allocation4], %s358
      %s361 = sshll.u32 [#allocation10], 4
      %s362 = int_to_ptr.vmem [resolvable:$true] %s361
      %364 = dma.vmem_to_hbm [thread:$0]  %s362, 128, %s7, [#allocation4]
    $region49: #{tpu_custom_call.1} parent=1 // pred_fallthru
      _
    // Predicated region
    $region50: #{tpu_custom_call.1} parent=1 // pred_check
      _
    $region51: #{tpu_custom_call.1} parent=1 // pred_check_branch
      %366 = sbr.rel (0) target = $region53
    $region52: #{tpu_custom_call.1} parent=1 // pred_region
      %367 = dma.done [#allocation4], 128
    $region53: #{tpu_custom_call.1} parent=1 // pred_fallthru
      _
    %368 = vsyncpa [#allocation3], 1
    %369 = vsyncpa [#allocation6], 1
    %370 = vsyncpa [#allocation9], 1
    %371 = vsyncpa [#allocation4], 1

</llo_original>
